<compile_context>
chip_gen: v5e
topology: v5e:2x2
jax: 0.10.0
libtpu: 0.0.40
codegen_flags: <defaults>
</compile_context>

<pallas_src>
import functools

import jax
import jax.numpy as jnp
from jax.experimental import pallas as pl
from jax.experimental.pallas import tpu as pltpu


def _mlp_kernel(x_ref, w1_ref, b1_ref, w2_ref, b2_ref, o_ref):
    # fc1: bf16 operands on the MXU, f32 accumulation.
    h = jnp.dot(x_ref[...], w1_ref[...], preferred_element_type=jnp.float32)
    # Bias add + tanh strictly in f32 (b1 broadcasts over the batch rows).
    h = jnp.tanh(h + b1_ref[...])
    # fc2: cast activated hidden back to bf16 for the MXU, accumulate in f32.
    out = jnp.dot(h.astype(jnp.bfloat16), w2_ref[...],
                  preferred_element_type=jnp.float32)
    o_ref[...] = (out + b2_ref[...]).astype(o_ref.dtype)


def _round_up(x, m):
    return ((x + m - 1) // m) * m


def prepare_params(w1, b1, w2, b2):
    """One-time parameter prep (hoisted out of the per-call forward).

    w1: [D, 128], b1: [128], w2: [128, N], b2: [N] (nn.Linear weights already
    transposed to row-major `x @ W` layout). Returns bf16 weights and f32
    biases with the output dim zero-padded to a lane-dense multiple of 128.
    """
    H = w1.shape[1]
    N = w2.shape[1]
    N_pad = 128 * pl.cdiv(N, 128)
    w1_b = w1.astype(jnp.bfloat16)                                     # [D, H]
    b1_f = b1.reshape(1, H).astype(jnp.float32)                        # [1, H]
    w2_p = jnp.pad(w2.astype(jnp.bfloat16), ((0, 0), (0, N_pad - N)))  # [H, N_pad]
    b2_p = jnp.pad(b2.reshape(1, N).astype(jnp.float32),
                   ((0, 0), (0, N_pad - N)))                           # [1, N_pad]
    return w1_b, b1_f, w2_p, b2_p


@functools.partial(jax.jit, static_argnames=("num_classes",))
def mlp_forward(x_nchw, w1_b, b1_f, w2_p, b2_p, *, num_classes):
    """Fused flatten -> fc1 -> tanh -> fc2.  Params come from prepare_params.

    x_nchw: [B, C, H, W] float32.  Returns logits [B, num_classes] float32.
    """
    B = x_nchw.shape[0]
    x = x_nchw.reshape(B, -1).astype(jnp.bfloat16)      # flatten(1) + MXU cast
    D = x.shape[1]
    H = w1_b.shape[1]
    N_pad = w2_p.shape[1]

    # Pad batch only to the bf16 sublane granule for small B; 128-row tiles
    # for large B.  (v5e: keep 128.  v6e/v7x large batch: see TODO above.)
    TM = min(128, _round_up(B, 16))
    M_pad = pl.cdiv(B, TM) * TM
    x_p = jnp.pad(x, ((0, M_pad - B), (0, 0)))          # pad the bf16 view

    single = pl.Buffered(1)   # constant-index blocks: no double-buffering
    out = pl.pallas_call(
        _mlp_kernel,
        out_shape=jax.ShapeDtypeStruct((M_pad, N_pad), jnp.float32),
        grid_spec=pltpu.PrefetchScalarGridSpec(
            num_scalar_prefetch=0,
            grid=(M_pad // TM,),
            in_specs=[
                pl.BlockSpec((TM, D), lambda i: (i, 0)),                # x tile
                pl.BlockSpec((D, H), lambda i: (0, 0),
                             pipeline_mode=single),                     # W1
                pl.BlockSpec((1, H), lambda i: (0, 0),
                             pipeline_mode=single),                     # b1
                pl.BlockSpec((H, N_pad), lambda i: (0, 0),
                             pipeline_mode=single),                     # W2 (padded)
                pl.BlockSpec((1, N_pad), lambda i: (0, 0),
                             pipeline_mode=single),                     # b2 (padded)
            ],
            out_specs=pl.BlockSpec((TM, N_pad), lambda i: (i, 0)),
        ),
        compiler_params=pltpu.CompilerParams(
            dimension_semantics=("parallel",)),   # shard M tiles across TCs (v7x)
    )(x_p, w1_b, b1_f, w2_p, b2_p)

    return out[:B, :num_classes]


def init_params(key, in_features, hidden=128, num_classes=10):
    """Deterministic init mimicking nn.Linear default (uniform +/-1/sqrt(fan_in))."""
    k1, k2, k3, k4 = jax.random.split(key, 4)
    lim1 = 1.0 / jnp.sqrt(in_features)
    lim2 = 1.0 / jnp.sqrt(hidden)
    w1 = jax.random.uniform(k1, (in_features, hidden), jnp.float32, -lim1, lim1)
    b1 = jax.random.uniform(k2, (hidden,), jnp.float32, -lim1, lim1)
    w2 = jax.random.uniform(k3, (hidden, num_classes), jnp.float32, -lim2, lim2)
    b2 = jax.random.uniform(k4, (num_classes,), jnp.float32, -lim2, lim2)
    return w1, b1, w2, b2


if __name__ == "__main__":
    key = jax.random.PRNGKey(0)
    kx, kp = jax.random.split(key)

    # Small CIFAR-like input: batch=2, channels=4, spatial=16x16 -> D=1024
    B, C, Hs, Ws = 2, 4, 16, 16
    num_classes = 10
    x = jax.random.normal(kx, (B, C, Hs, Ws), jnp.float32)

    w1, b1, w2, b2 = init_params(kp, C * Hs * Ws, hidden=128,
                                 num_classes=num_classes)

    # One-time param preparation (kept/reused across forward calls).
    params = jax.block_until_ready(prepare_params(w1, b1, w2, b2))

    out = mlp_forward(x, *params, num_classes=num_classes)
    out = jax.block_until_ready(out)

    # Reference in plain f32 JAX (same math as the PyTorch forward).
    ref = jnp.tanh(x.reshape(B, -1) @ w1 + b1) @ w2 + b2
    assert out.shape == (B, num_classes)
    # Looser tolerance: MXU operands are bf16 (f32 accumulation).
    assert jnp.allclose(out, ref, atol=2e-2, rtol=2e-2), (
        float(jnp.max(jnp.abs(out - ref))))

    print("KERNEL_OK")
</pallas_src>

<mosaic_0001>
module attributes {stable_mosaic.version = 11 : i64} {
  func.func @_mlp_kernel(%arg0: i32, %arg1: memref<16x1024xbf16, #tpu.memory_space<vmem>>, %arg2: memref<1024x128xbf16, #tpu.memory_space<vmem>>, %arg3: memref<1x128xf32, #tpu.memory_space<vmem>>, %arg4: memref<128x128xbf16, #tpu.memory_space<vmem>>, %arg5: memref<1x128xf32, #tpu.memory_space<vmem>>, %arg6: memref<16x128xf32, #tpu.memory_space<vmem>>) attributes {dimension_semantics = [#tpu.dimension_semantics<parallel>], iteration_bounds = array<i64: 1>, scalar_prefetch = 0 : i64, scratch_operands = 0 : i64, tpu.core_type = #tpu.core_type<tc>, window_params = [{transform_indices = @transform_0, window_bounds = array<i64: 16, 1024>}, {pipeline_mode = #tpu.pipeline_mode<synchronous>, transform_indices = @transform_1, window_bounds = array<i64: 1024, 128>}, {pipeline_mode = #tpu.pipeline_mode<synchronous>, transform_indices = @transform_2, window_bounds = array<i64: 1, 128>}, {pipeline_mode = #tpu.pipeline_mode<synchronous>, transform_indices = @transform_3, window_bounds = array<i64: 128, 128>}, {pipeline_mode = #tpu.pipeline_mode<synchronous>, transform_indices = @transform_4, window_bounds = array<i64: 1, 128>}, {transform_indices = @transform_5, window_bounds = array<i64: 16, 128>}]} {
    %c0 = arith.constant 0 : index
    %c0_0 = arith.constant 0 : index
    %0 = vector.load %arg1[%c0, %c0_0] : memref<16x1024xbf16, #tpu.memory_space<vmem>>, vector<16x1024xbf16>
    %c0_1 = arith.constant 0 : index
    %c0_2 = arith.constant 0 : index
    %1 = vector.load %arg2[%c0_1, %c0_2] : memref<1024x128xbf16, #tpu.memory_space<vmem>>, vector<1024x128xbf16>
    %cst = arith.constant dense<0.000000e+00> : vector<16x128xf32>
    %2 = tpu.matmul %0, %1, %cst {dimension_numbers = #tpu.dot_dimension_numbers<[1], [0], [0], [1], [0, 0, 1, 1], [], []>} : vector<16x1024xbf16>, vector<1024x128xbf16>, vector<16x128xf32> -> vector<16x128xf32>
    %c0_3 = arith.constant 0 : index
    %c0_4 = arith.constant 0 : index
    %3 = vector.load %arg3[%c0_3, %c0_4] : memref<1x128xf32, #tpu.memory_space<vmem>>, vector<1x128xf32>
    %4 = vector.broadcast %3 : vector<1x128xf32> to vector<16x128xf32>
    %5 = arith.addf %2, %4 : vector<16x128xf32>
    %6 = math.tanh %5 : vector<16x128xf32>
    %7 = arith.truncf %6 : vector<16x128xf32> to vector<16x128xbf16>
    %c0_5 = arith.constant 0 : index
    %c0_6 = arith.constant 0 : index
    %8 = vector.load %arg4[%c0_5, %c0_6] : memref<128x128xbf16, #tpu.memory_space<vmem>>, vector<128x128xbf16>
    %cst_7 = arith.constant dense<0.000000e+00> : vector<16x128xf32>
    %9 = tpu.matmul %7, %8, %cst_7 {dimension_numbers = #tpu.dot_dimension_numbers<[1], [0], [0], [1], [0, 0, 1, 1], [], []>} : vector<16x128xbf16>, vector<128x128xbf16>, vector<16x128xf32> -> vector<16x128xf32>
    %c0_8 = arith.constant 0 : index
    %c0_9 = arith.constant 0 : index
    %10 = vector.load %arg5[%c0_8, %c0_9] : memref<1x128xf32, #tpu.memory_space<vmem>>, vector<1x128xf32>
    %11 = vector.broadcast %10 : vector<1x128xf32> to vector<16x128xf32>
    %12 = arith.addf %9, %11 : vector<16x128xf32>
    %c0_10 = arith.constant 0 : index
    %c0_11 = arith.constant 0 : index
    %13 = vector.load %arg6[%c0_10, %c0_11] : memref<16x128xf32, #tpu.memory_space<vmem>>, vector<16x128xf32>
    tpu.vector_store %arg6[%c0_10, %c0_11], %12 {strides = array<i32>} : memref<16x128xf32, #tpu.memory_space<vmem>>, vector<16x128xf32>,
    return
  }
  func.func @transform_0(%arg0: i32) -> (i32, i32) {
    %c0_i32 = arith.constant 0 : i32
    %c0_i32_0 = arith.constant 0 : i32
    return %arg0, %c0_i32 : i32, i32
  }
  func.func @transform_1(%arg0: i32) -> (i32, i32) {
    %c0_i32 = arith.constant 0 : i32
    %c0_i32_0 = arith.constant 0 : i32
    %c0_i32_1 = arith.constant 0 : i32
    return %c0_i32, %c0_i32_0 : i32, i32
  }
  func.func @transform_2(%arg0: i32) -> (i32, i32) {
    %c0_i32 = arith.constant 0 : i32
    %c0_i32_0 = arith.constant 0 : i32
    %c0_i32_1 = arith.constant 0 : i32
    return %c0_i32, %c0_i32_0 : i32, i32
  }
  func.func @transform_3(%arg0: i32) -> (i32, i32) {
    %c0_i32 = arith.constant 0 : i32
    %c0_i32_0 = arith.constant 0 : i32
    %c0_i32_1 = arith.constant 0 : i32
    return %c0_i32, %c0_i32_0 : i32, i32
  }
  func.func @transform_4(%arg0: i32) -> (i32, i32) {
    %c0_i32 = arith.constant 0 : i32
    %c0_i32_0 = arith.constant 0 : i32
    %c0_i32_1 = arith.constant 0 : i32
    return %c0_i32, %c0_i32_0 : i32, i32
  }
  func.func @transform_5(%arg0: i32) -> (i32, i32) {
    %c0_i32 = arith.constant 0 : i32
    %c0_i32_0 = arith.constant 0 : i32
    return %arg0, %c0_i32 : i32, i32
  }
}

</mosaic_0001>

<llo_original>
// kernel: mlp_forward.1
$region0: #{mlp_forward.1}
  #allocation0 [shape = 'u32[]', space=smem, size = 0x4, offset = 0x4, fixed_abs, tag = 'smem constant byte address 0x4 - core index']
  #allocation1 [shape = 'u32[72,128]{1,0:T(1,128)}', space=vmem, size = 0x9000, scoped, tag = 'internal scratch']
  %s0 = inlined_call_operand.vmem [shape: bf16[16,1024], index: 0, kind: input, shape index: {}]
  %s1 = inlined_call_operand.hbm [shape: bf16[1024,128], index: 1, kind: input, shape index: {}]
  %s2 = inlined_call_operand.vmem [shape: f32[1,128], index: 2, kind: input, shape index: {}]
  %s3 = inlined_call_operand.vmem [shape: bf16[128,128], index: 3, kind: input, shape index: {}]
  %s4 = inlined_call_operand.vmem [shape: f32[1,128], index: 4, kind: input, shape index: {}]
  %s5 = inlined_call_operand.vmem [shape: f32[16,128], index: 5, kind: output, shape index: {}]
  %s6 = sld [smem:[#allocation0]]
  $region34: #{mlp_forward.1} parent=0
    _
  %s8 = ssub.s32 1, %s6
  %s9 = scalar_select 0, %s8, %s6
  $region1: #{mlp_forward.1} parent=0
    #allocation2 [shape = 'u8[262144]{0}', space=vmem, size = 0x40000, scoped, tag = 'input window, operand 1, single buffered']
    #allocation3 [shape = 's32[1]{0}', space=sflag, size = 0x4, scoped, tag = 'scoped memory for mlp_forward.1']
    %10 = vsyncpa [#allocation3], 0
    // Predicated region
    $region2: #{mlp_forward.1} parent=1 // pred_check
      _
    $region3: #{mlp_forward.1} parent=1 // pred_check_branch
      %12 = sbr.rel (0) target = $region5
    $region4: #{mlp_forward.1} parent=1 // pred_region
      _
    $region5: #{mlp_forward.1} parent=1 // pred_fallthru
      _
    // Predicated region
    $region6: #{mlp_forward.1} parent=1 // pred_check
      _
    $region7: #{mlp_forward.1} parent=1 // pred_check_branch
      %14 = sbr.rel (0) target = $region9
    $region8: #{mlp_forward.1} parent=1 // pred_region
      %16 = vsyncadd [#allocation3], 0
      %s17 = sshll.u32 %s1, 4
      %s18 = int_to_ptr.hbm [resolvable:$true] %s17
      %s19 = sshll.u32 [#allocation2], 4
      %s20 = int_to_ptr.vmem [resolvable:$true] %s19
      %25 = dma.hbm_to_vmem [thread:$0]  %s18, 8192, %s20, [#allocation3], 64, 64, 4
    $region9: #{mlp_forward.1} parent=1 // pred_fallthru
      _
    // Predicated region
    $region10: #{mlp_forward.1} parent=1 // pred_check
      _
    $region11: #{mlp_forward.1} parent=1 // pred_check_branch
      %27 = sbr.rel (0) target = $region13
    $region12: #{mlp_forward.1} parent=1 // pred_region
      _
    $region13: #{mlp_forward.1} parent=1 // pred_fallthru
      _
    // Predicated region
    $region14: #{mlp_forward.1} parent=1 // pred_check
      _
    $region15: #{mlp_forward.1} parent=1 // pred_check_branch
      %29 = sbr.rel (0) target = $region17
    $region16: #{mlp_forward.1} parent=1 // pred_region
      _
    $region17: #{mlp_forward.1} parent=1 // pred_fallthru
      _
    // Predicated region
    $region18: #{mlp_forward.1} parent=1 // pred_check
      _
    $region19: #{mlp_forward.1} parent=1 // pred_check_branch
      %31 = sbr.rel (0) target = $region21
    $region20: #{mlp_forward.1} parent=1 // pred_region
      _
    $region21: #{mlp_forward.1} parent=1 // pred_fallthru
      _
    // Predicated region
    $region22: #{mlp_forward.1} parent=1 // pred_check
      _
    $region23: #{mlp_forward.1} parent=1 // pred_check_branch
      %33 = sbr.rel (0) target = $region25
    $region24: #{mlp_forward.1} parent=1 // pred_region
      %35 = dma.done [#allocation3], 8192
    $region25: #{mlp_forward.1} parent=1 // pred_fallthru
      _
    %v36 = vld [vmem:[%s0] sm:$0xff]
    %v37 = vld [vmem:[%s0 + $0x8] sm:$0xff]
    %v38 = vld [vmem:[%s0 + $0x10] sm:$0xff]
    %v39 = vld [vmem:[%s0 + $0x18] sm:$0xff]
    %v40 = vld [vmem:[%s0 + $0x20] sm:$0xff]
    %v41 = vld [vmem:[%s0 + $0x28] sm:$0xff]
    %v42 = vld [vmem:[%s0 + $0x30] sm:$0xff]
    %v43 = vld [vmem:[%s0 + $0x38] sm:$0xff]
    %v44 = vld [vmem:[#allocation2] sm:$0xf]
    %v45 = vld [vmem:[#allocation2 + $0x4] sm:$0xf]
    %v46 = vld [vmem:[#allocation2 + $0x8] sm:$0xf]
    %v47 = vld [vmem:[#allocation2 + $0xc] sm:$0xf]
    %v48 = vld [vmem:[#allocation2 + $0x10] sm:$0xf]
    %v49 = vld [vmem:[#allocation2 + $0x14] sm:$0xf]
    %v50 = vld [vmem:[#allocation2 + $0x18] sm:$0xf]
    %v51 = vld [vmem:[#allocation2 + $0x1c] sm:$0xf]
    %v52 = vld [vmem:[#allocation2 + $0x20] sm:$0xf]
    %v53 = vld [vmem:[#allocation2 + $0x24] sm:$0xf]
    %v54 = vld [vmem:[#allocation2 + $0x28] sm:$0xf]
    %v55 = vld [vmem:[#allocation2 + $0x2c] sm:$0xf]
    %v56 = vld [vmem:[#allocation2 + $0x30] sm:$0xf]
    %v57 = vld [vmem:[#allocation2 + $0x34] sm:$0xf]
    %v58 = vld [vmem:[#allocation2 + $0x38] sm:$0xf]
    %v59 = vld [vmem:[#allocation2 + $0x3c] sm:$0xf]
    %v60 = vld [vmem:[#allocation2 + $0x40] sm:$0xf]
    %v61 = vld [vmem:[#allocation2 + $0x44] sm:$0xf]
    %v62 = vld [vmem:[#allocation2 + $0x48] sm:$0xf]
    %v63 = vld [vmem:[#allocation2 + $0x4c] sm:$0xf]
    %v64 = vld [vmem:[#allocation2 + $0x50] sm:$0xf]
    %v65 = vld [vmem:[#allocation2 + $0x54] sm:$0xf]
    %v66 = vld [vmem:[#allocation2 + $0x58] sm:$0xf]
    %v67 = vld [vmem:[#allocation2 + $0x5c] sm:$0xf]
    %v68 = vld [vmem:[#allocation2 + $0x60] sm:$0xf]
    %v69 = vld [vmem:[#allocation2 + $0x64] sm:$0xf]
    %v70 = vld [vmem:[#allocation2 + $0x68] sm:$0xf]
    %v71 = vld [vmem:[#allocation2 + $0x6c] sm:$0xf]
    %v72 = vld [vmem:[#allocation2 + $0x70] sm:$0xf]
    %v73 = vld [vmem:[#allocation2 + $0x74] sm:$0xf]
    %v74 = vld [vmem:[#allocation2 + $0x78] sm:$0xf]
    %v75 = vld [vmem:[#allocation2 + $0x7c] sm:$0xf]
    %v76 = vld [vmem:[#allocation2 + $0x80] sm:$0xf]
    %v77 = vld [vmem:[#allocation2 + $0x84] sm:$0xf]
    %v78 = vld [vmem:[#allocation2 + $0x88] sm:$0xf]
    %v79 = vld [vmem:[#allocation2 + $0x8c] sm:$0xf]
    %v80 = vld [vmem:[#allocation2 + $0x90] sm:$0xf]
    %v81 = vld [vmem:[#allocation2 + $0x94] sm:$0xf]
    %v82 = vld [vmem:[#allocation2 + $0x98] sm:$0xf]
    %v83 = vld [vmem:[#allocation2 + $0x9c] sm:$0xf]
    %v84 = vld [vmem:[#allocation2 + $0xa0] sm:$0xf]
    %v85 = vld [vmem:[#allocation2 + $0xa4] sm:$0xf]
    %v86 = vld [vmem:[#allocation2 + $0xa8] sm:$0xf]
    %v87 = vld [vmem:[#allocation2 + $0xac] sm:$0xf]
    %v88 = vld [vmem:[#allocation2 + $0xb0] sm:$0xf]
    %v89 = vld [vmem:[#allocation2 + $0xb4] sm:$0xf]
    %v90 = vld [vmem:[#allocation2 + $0xb8] sm:$0xf]
    %v91 = vld [vmem:[#allocation2 + $0xbc] sm:$0xf]
    %v92 = vld [vmem:[#allocation2 + $0xc0] sm:$0xf]
    %v93 = vld [vmem:[#allocation2 + $0xc4] sm:$0xf]
    %v94 = vld [vmem:[#allocation2 + $0xc8] sm:$0xf]
    %v95 = vld [vmem:[#allocation2 + $0xcc] sm:$0xf]
    %v96 = vld [vmem:[#allocation2 + $0xd0] sm:$0xf]
    %v97 = vld [vmem:[#allocation2 + $0xd4] sm:$0xf]
    %v98 = vld [vmem:[#allocation2 + $0xd8] sm:$0xf]
    %v99 = vld [vmem:[#allocation2 + $0xdc] sm:$0xf]
    %v100 = vld [vmem:[#allocation2 + $0xe0] sm:$0xf]
    %v101 = vld [vmem:[#allocation2 + $0xe4] sm:$0xf]
    %v102 = vld [vmem:[#allocation2 + $0xe8] sm:$0xf]
    %v103 = vld [vmem:[#allocation2 + $0xec] sm:$0xf]
    %v104 = vld [vmem:[#allocation2 + $0xf0] sm:$0xf]
    %v105 = vld [vmem:[#allocation2 + $0xf4] sm:$0xf]
    %v106 = vld [vmem:[#allocation2 + $0xf8] sm:$0xf]
    %v107 = vld [vmem:[#allocation2 + $0xfc] sm:$0xf]
    %v108 = vld [vmem:[#allocation2 + $0x100] sm:$0xf]
    %v109 = vld [vmem:[#allocation2 + $0x104] sm:$0xf]
    %v110 = vld [vmem:[#allocation2 + $0x108] sm:$0xf]
    %v111 = vld [vmem:[#allocation2 + $0x10c] sm:$0xf]
    %v112 = vld [vmem:[#allocation2 + $0x110] sm:$0xf]
    %v113 = vld [vmem:[#allocation2 + $0x114] sm:$0xf]
    %v114 = vld [vmem:[#allocation2 + $0x118] sm:$0xf]
    %v115 = vld [vmem:[#allocation2 + $0x11c] sm:$0xf]
    %v116 = vld [vmem:[#allocation2 + $0x120] sm:$0xf]
    %v117 = vld [vmem:[#allocation2 + $0x124] sm:$0xf]
    %v118 = vld [vmem:[#allocation2 + $0x128] sm:$0xf]
    %v119 = vld [vmem:[#allocation2 + $0x12c] sm:$0xf]
    %v120 = vld [vmem:[#allocation2 + $0x130] sm:$0xf]
    %v121 = vld [vmem:[#allocation2 + $0x134] sm:$0xf]
    %v122 = vld [vmem:[#allocation2 + $0x138] sm:$0xf]
    %v123 = vld [vmem:[#allocation2 + $0x13c] sm:$0xf]
    %v124 = vld [vmem:[#allocation2 + $0x140] sm:$0xf]
    %v125 = vld [vmem:[#allocation2 + $0x144] sm:$0xf]
    %v126 = vld [vmem:[#allocation2 + $0x148] sm:$0xf]
    %v127 = vld [vmem:[#allocation2 + $0x14c] sm:$0xf]
    %v128 = vld [vmem:[#allocation2 + $0x150] sm:$0xf]
    %v129 = vld [vmem:[#allocation2 + $0x154] sm:$0xf]
    %v130 = vld [vmem:[#allocation2 + $0x158] sm:$0xf]
    %v131 = vld [vmem:[#allocation2 + $0x15c] sm:$0xf]
    %v132 = vld [vmem:[#allocation2 + $0x160] sm:$0xf]
    %v133 = vld [vmem:[#allocation2 + $0x164] sm:$0xf]
    %v134 = vld [vmem:[#allocation2 + $0x168] sm:$0xf]
    %v135 = vld [vmem:[#allocation2 + $0x16c] sm:$0xf]
    %v136 = vld [vmem:[#allocation2 + $0x170] sm:$0xf]
    %v137 = vld [vmem:[#allocation2 + $0x174] sm:$0xf]
    %v138 = vld [vmem:[#allocation2 + $0x178] sm:$0xf]
    %v139 = vld [vmem:[#allocation2 + $0x17c] sm:$0xf]
    %v140 = vld [vmem:[#allocation2 + $0x180] sm:$0xf]
    %v141 = vld [vmem:[#allocation2 + $0x184] sm:$0xf]
    %v142 = vld [vmem:[#allocation2 + $0x188] sm:$0xf]
    %v143 = vld [vmem:[#allocation2 + $0x18c] sm:$0xf]
    %v144 = vld [vmem:[#allocation2 + $0x190] sm:$0xf]
    %v145 = vld [vmem:[#allocation2 + $0x194] sm:$0xf]
    %v146 = vld [vmem:[#allocation2 + $0x198] sm:$0xf]
    %v147 = vld [vmem:[#allocation2 + $0x19c] sm:$0xf]
    %v148 = vld [vmem:[#allocation2 + $0x1a0] sm:$0xf]
    %v149 = vld [vmem:[#allocation2 + $0x1a4] sm:$0xf]
    %v150 = vld [vmem:[#allocation2 + $0x1a8] sm:$0xf]
    %v151 = vld [vmem:[#allocation2 + $0x1ac] sm:$0xf]
    %v152 = vld [vmem:[#allocation2 + $0x1b0] sm:$0xf]
    %v153 = vld [vmem:[#allocation2 + $0x1b4] sm:$0xf]
    %v154 = vld [vmem:[#allocation2 + $0x1b8] sm:$0xf]
    %v155 = vld [vmem:[#allocation2 + $0x1bc] sm:$0xf]
    %v156 = vld [vmem:[#allocation2 + $0x1c0] sm:$0xf]
    %v157 = vld [vmem:[#allocation2 + $0x1c4] sm:$0xf]
    %v158 = vld [vmem:[#allocation2 + $0x1c8] sm:$0xf]
    %v159 = vld [vmem:[#allocation2 + $0x1cc] sm:$0xf]
    %v160 = vld [vmem:[#allocation2 + $0x1d0] sm:$0xf]
    %v161 = vld [vmem:[#allocation2 + $0x1d4] sm:$0xf]
    %v162 = vld [vmem:[#allocation2 + $0x1d8] sm:$0xf]
    %v163 = vld [vmem:[#allocation2 + $0x1dc] sm:$0xf]
    %v164 = vld [vmem:[#allocation2 + $0x1e0] sm:$0xf]
    %v165 = vld [vmem:[#allocation2 + $0x1e4] sm:$0xf]
    %v166 = vld [vmem:[#allocation2 + $0x1e8] sm:$0xf]
    %v167 = vld [vmem:[#allocation2 + $0x1ec] sm:$0xf]
    %v168 = vld [vmem:[#allocation2 + $0x1f0] sm:$0xf]
    %v169 = vld [vmem:[#allocation2 + $0x1f4] sm:$0xf]
    %v170 = vld [vmem:[#allocation2 + $0x1f8] sm:$0xf]
    %v171 = vld [vmem:[#allocation2 + $0x1fc] sm:$0xf]
    %v172 = vld [vmem:[%s2] sm:$0x1]
    %v174 = vperm.slane %v172, 0
    %v184 = vunpack.c.l.b16 %v36
    %v185 = vunpack.c.h.b16 %v36
    %v186 = vunpack.c.l.b16 %v37
    %v187 = vunpack.c.h.b16 %v37
    %v188 = vunpack.c.l.b16 %v38
    %v189 = vunpack.c.h.b16 %v38
    %v190 = vunpack.c.l.b16 %v39
    %v191 = vunpack.c.h.b16 %v39
    %v192 = vunpack.c.l.b16 %v40
    %v193 = vunpack.c.h.b16 %v40
    %v194 = vunpack.c.l.b16 %v41
    %v195 = vunpack.c.h.b16 %v41
    %v196 = vunpack.c.l.b16 %v42
    %v197 = vunpack.c.h.b16 %v42
    %v198 = vunpack.c.l.b16 %v43
    %v199 = vunpack.c.h.b16 %v43
    %v200 = vpack.c.b16 %v192, %v184
    %v201 = vpack.c.b16 %v193, %v185
    %v202 = vpack.c.b16 %v194, %v186
    %v203 = vpack.c.b16 %v195, %v187
    %v204 = vpack.c.b16 %v196, %v188
    %v205 = vpack.c.b16 %v197, %v189
    %v206 = vpack.c.b16 %v198, %v190
    %v207 = vpack.c.b16 %v199, %v191
    %v344 = vunpack.c.l.b16 %v44
    %v345 = vunpack.c.l.b16 %v45
    %v346 = vunpack.c.l.b16 %v46
    %v347 = vunpack.c.l.b16 %v47
    %v348 = vunpack.c.l.b16 %v48
    %v349 = vunpack.c.l.b16 %v49
    %v350 = vunpack.c.l.b16 %v50
    %v351 = vunpack.c.l.b16 %v51
    %v352 = vunpack.c.l.b16 %v52
    %v353 = vunpack.c.l.b16 %v53
    %v354 = vunpack.c.l.b16 %v54
    %v355 = vunpack.c.l.b16 %v55
    %v356 = vunpack.c.l.b16 %v56
    %v357 = vunpack.c.l.b16 %v57
    %v358 = vunpack.c.l.b16 %v58
    %v359 = vunpack.c.l.b16 %v59
    %v360 = vunpack.c.l.b16 %v60
    %v361 = vunpack.c.l.b16 %v61
    %v362 = vunpack.c.l.b16 %v62
    %v363 = vunpack.c.l.b16 %v63
    %v364 = vunpack.c.l.b16 %v64
    %v365 = vunpack.c.l.b16 %v65
    %v366 = vunpack.c.l.b16 %v66
    %v367 = vunpack.c.l.b16 %v67
    %v368 = vunpack.c.l.b16 %v68
    %v369 = vunpack.c.l.b16 %v69
    %v370 = vunpack.c.l.b16 %v70
    %v371 = vunpack.c.l.b16 %v71
    %v372 = vunpack.c.l.b16 %v72
    %v373 = vunpack.c.l.b16 %v73
    %v374 = vunpack.c.l.b16 %v74
    %v375 = vunpack.c.l.b16 %v75
    %v376 = vunpack.c.l.b16 %v76
    %v377 = vunpack.c.l.b16 %v77
    %v378 = vunpack.c.l.b16 %v78
    %v379 = vunpack.c.l.b16 %v79
    %v380 = vunpack.c.l.b16 %v80
    %v381 = vunpack.c.l.b16 %v81
    %v382 = vunpack.c.l.b16 %v82
    %v383 = vunpack.c.l.b16 %v83
    %v384 = vunpack.c.l.b16 %v84
    %v385 = vunpack.c.l.b16 %v85
    %v386 = vunpack.c.l.b16 %v86
    %v387 = vunpack.c.l.b16 %v87
    %v388 = vunpack.c.l.b16 %v88
    %v389 = vunpack.c.l.b16 %v89
    %v390 = vunpack.c.l.b16 %v90
    %v391 = vunpack.c.l.b16 %v91
    %v392 = vunpack.c.l.b16 %v92
    %v393 = vunpack.c.l.b16 %v93
    %v394 = vunpack.c.l.b16 %v94
    %v395 = vunpack.c.l.b16 %v95
    %v396 = vunpack.c.l.b16 %v96
    %v397 = vunpack.c.l.b16 %v97
    %v398 = vunpack.c.l.b16 %v98
    %v399 = vunpack.c.l.b16 %v99
    %v400 = vunpack.c.l.b16 %v100
    %v401 = vunpack.c.l.b16 %v101
    %v402 = vunpack.c.l.b16 %v102
    %v403 = vunpack.c.l.b16 %v103
    %v404 = vunpack.c.l.b16 %v104
    %v405 = vunpack.c.l.b16 %v105
    %v406 = vunpack.c.l.b16 %v106
    %v407 = vunpack.c.l.b16 %v107
    %v408 = vunpack.c.l.b16 %v108
    %v409 = vunpack.c.l.b16 %v109
    %v410 = vunpack.c.l.b16 %v110
    %v411 = vunpack.c.l.b16 %v111
    %v412 = vunpack.c.l.b16 %v112
    %v413 = vunpack.c.l.b16 %v113
    %v414 = vunpack.c.l.b16 %v114
    %v415 = vunpack.c.l.b16 %v115
    %v416 = vunpack.c.l.b16 %v116
    %v417 = vunpack.c.l.b16 %v117
    %v418 = vunpack.c.l.b16 %v118
    %v419 = vunpack.c.l.b16 %v119
    %v420 = vunpack.c.l.b16 %v120
    %v421 = vunpack.c.l.b16 %v121
    %v422 = vunpack.c.l.b16 %v122
    %v423 = vunpack.c.l.b16 %v123
    %v424 = vunpack.c.l.b16 %v124
    %v425 = vunpack.c.l.b16 %v125
    %v426 = vunpack.c.l.b16 %v126
    %v427 = vunpack.c.l.b16 %v127
    %v428 = vunpack.c.l.b16 %v128
    %v429 = vunpack.c.l.b16 %v129
    %v430 = vunpack.c.l.b16 %v130
    %v431 = vunpack.c.l.b16 %v131
    %v432 = vunpack.c.l.b16 %v132
    %v433 = vunpack.c.l.b16 %v133
    %v434 = vunpack.c.l.b16 %v134
    %v435 = vunpack.c.l.b16 %v135
    %v436 = vunpack.c.l.b16 %v136
    %v437 = vunpack.c.l.b16 %v137
    %v438 = vunpack.c.l.b16 %v138
    %v439 = vunpack.c.l.b16 %v139
    %v440 = vunpack.c.l.b16 %v140
    %v441 = vunpack.c.l.b16 %v141
    %v442 = vunpack.c.l.b16 %v142
    %v443 = vunpack.c.l.b16 %v143
    %v444 = vunpack.c.l.b16 %v144
    %v445 = vunpack.c.l.b16 %v145
    %v446 = vunpack.c.l.b16 %v146
    %v447 = vunpack.c.l.b16 %v147
    %v448 = vunpack.c.l.b16 %v148
    %v449 = vunpack.c.l.b16 %v149
    %v450 = vunpack.c.l.b16 %v150
    %v451 = vunpack.c.l.b16 %v151
    %v452 = vunpack.c.l.b16 %v152
    %v453 = vunpack.c.l.b16 %v153
    %v454 = vunpack.c.l.b16 %v154
    %v455 = vunpack.c.l.b16 %v155
    %v456 = vunpack.c.l.b16 %v156
    %v457 = vunpack.c.l.b16 %v157
    %v458 = vunpack.c.l.b16 %v158
    %v459 = vunpack.c.l.b16 %v159
    %v460 = vunpack.c.l.b16 %v160
    %v461 = vunpack.c.l.b16 %v161
    %v462 = vunpack.c.l.b16 %v162
    %v463 = vunpack.c.l.b16 %v163
    %v464 = vunpack.c.l.b16 %v164
    %v465 = vunpack.c.l.b16 %v165
    %v466 = vunpack.c.l.b16 %v166
    %v467 = vunpack.c.l.b16 %v167
    %v468 = vunpack.c.l.b16 %v168
    %v469 = vunpack.c.l.b16 %v169
    %v470 = vunpack.c.l.b16 %v170
    %v471 = vunpack.c.l.b16 %v171
    %v472 = vpack.c.b16 %v345, %v344
    %v473 = vpack.c.b16 %v347, %v346
    %v474 = vpack.c.b16 %v349, %v348
    %v475 = vpack.c.b16 %v351, %v350
    %v476 = vpack.c.b16 %v353, %v352
    %v477 = vpack.c.b16 %v355, %v354
    %v478 = vpack.c.b16 %v357, %v356
    %v479 = vpack.c.b16 %v359, %v358
    %v480 = vpack.c.b16 %v361, %v360
    %v481 = vpack.c.b16 %v363, %v362
    %v482 = vpack.c.b16 %v365, %v364
    %v483 = vpack.c.b16 %v367, %v366
    %v484 = vpack.c.b16 %v369, %v368
    %v485 = vpack.c.b16 %v371, %v370
    %v486 = vpack.c.b16 %v373, %v372
    %v487 = vpack.c.b16 %v375, %v374
    %v488 = vpack.c.b16 %v377, %v376
    %v489 = vpack.c.b16 %v379, %v378
    %v490 = vpack.c.b16 %v381, %v380
    %v491 = vpack.c.b16 %v383, %v382
    %v492 = vpack.c.b16 %v385, %v384
    %v493 = vpack.c.b16 %v387, %v386
    %v494 = vpack.c.b16 %v389, %v388
    %v495 = vpack.c.b16 %v391, %v390
    %v496 = vpack.c.b16 %v393, %v392
    %v497 = vpack.c.b16 %v395, %v394
    %v498 = vpack.c.b16 %v397, %v396
    %v499 = vpack.c.b16 %v399, %v398
    %v500 = vpack.c.b16 %v401, %v400
    %v501 = vpack.c.b16 %v403, %v402
    %v502 = vpack.c.b16 %v405, %v404
    %v503 = vpack.c.b16 %v407, %v406
    %v504 = vpack.c.b16 %v409, %v408
    %v505 = vpack.c.b16 %v411, %v410
    %v506 = vpack.c.b16 %v413, %v412
    %v507 = vpack.c.b16 %v415, %v414
    %v508 = vpack.c.b16 %v417, %v416
    %v509 = vpack.c.b16 %v419, %v418
    %v510 = vpack.c.b16 %v421, %v420
    %v511 = vpack.c.b16 %v423, %v422
    %v512 = vpack.c.b16 %v425, %v424
    %v513 = vpack.c.b16 %v427, %v426
    %v514 = vpack.c.b16 %v429, %v428
    %v515 = vpack.c.b16 %v431, %v430
    %v516 = vpack.c.b16 %v433, %v432
    %v517 = vpack.c.b16 %v435, %v434
    %v518 = vpack.c.b16 %v437, %v436
    %v519 = vpack.c.b16 %v439, %v438
    %v520 = vpack.c.b16 %v441, %v440
    %v521 = vpack.c.b16 %v443, %v442
    %v522 = vpack.c.b16 %v445, %v444
    %v523 = vpack.c.b16 %v447, %v446
    %v524 = vpack.c.b16 %v449, %v448
    %v525 = vpack.c.b16 %v451, %v450
    %v526 = vpack.c.b16 %v453, %v452
    %v527 = vpack.c.b16 %v455, %v454
    %v528 = vpack.c.b16 %v457, %v456
    %v529 = vpack.c.b16 %v459, %v458
    %v530 = vpack.c.b16 %v461, %v460
    %v531 = vpack.c.b16 %v463, %v462
    %v532 = vpack.c.b16 %v465, %v464
    %v533 = vpack.c.b16 %v467, %v466
    %v534 = vpack.c.b16 %v469, %v468
    %v535 = vpack.c.b16 %v471, %v470
    %600 = vmatpush.bf16.msra.mxu0 %v479
    %601 = vmatpush.bf16.msra.mxu0 %v478
    %602 = vmatpush.bf16.msra.mxu0 %v477
    %603 = vmatpush.bf16.msra.mxu0 %v476
    %604 = vmatpush.bf16.msra.mxu0 %v475
    %605 = vmatpush.bf16.msra.mxu0 %v474
    %606 = vmatpush.bf16.msra.mxu0 %v473
    %607 = vmatpush.bf16.msra.mxu0 %v472
    %608 = vmatmul.bf16.gmra.mxu0 %v200
    %v609 = vpop.f32.mrf.mxu0
    %v610 = vadd.f32 %v174, %v609
    %v611 = vpop.f32.mrf.mxu0
    %v612 = vadd.f32 %v174, %v611
    %613 = vdwg.mxu0
    %614 = vmatpush.bf16.msra.mxu0 %v487
    %615 = vmatpush.bf16.msra.mxu0 %v486
    %616 = vmatpush.bf16.msra.mxu0 %v485
    %617 = vmatpush.bf16.msra.mxu0 %v484
    %618 = vmatpush.bf16.msra.mxu0 %v483
    %619 = vmatpush.bf16.msra.mxu0 %v482
    %620 = vmatpush.bf16.msra.mxu0 %v481
    %621 = vmatpush.bf16.msra.mxu0 %v480
    %622 = vmatmul.bf16.gmra.mxu0 %v201
    %v623 = vpop.f32.mrf.mxu0
    %v624 = vadd.f32 %v610, %v623
    %v625 = vpop.f32.mrf.mxu0
    %v626 = vadd.f32 %v612, %v625
    %627 = vdwg.mxu0
    %628 = vmatpush.bf16.msra.mxu0 %v495
    %629 = vmatpush.bf16.msra.mxu0 %v494
    %630 = vmatpush.bf16.msra.mxu0 %v493
    %631 = vmatpush.bf16.msra.mxu0 %v492
    %632 = vmatpush.bf16.msra.mxu0 %v491
    %633 = vmatpush.bf16.msra.mxu0 %v490
    %634 = vmatpush.bf16.msra.mxu0 %v489
    %635 = vmatpush.bf16.msra.mxu0 %v488
    %636 = vmatmul.bf16.gmra.mxu0 %v202
    %v637 = vpop.f32.mrf.mxu0
    %v638 = vadd.f32 %v624, %v637
    %v639 = vpop.f32.mrf.mxu0
    %v640 = vadd.f32 %v626, %v639
    %641 = vdwg.mxu0
    %642 = vmatpush.bf16.msra.mxu0 %v503
    %643 = vmatpush.bf16.msra.mxu0 %v502
    %644 = vmatpush.bf16.msra.mxu0 %v501
    %645 = vmatpush.bf16.msra.mxu0 %v500
    %646 = vmatpush.bf16.msra.mxu0 %v499
    %647 = vmatpush.bf16.msra.mxu0 %v498
    %648 = vmatpush.bf16.msra.mxu0 %v497
    %649 = vmatpush.bf16.msra.mxu0 %v496
    %650 = vmatmul.bf16.gmra.mxu0 %v203
    %v651 = vpop.f32.mrf.mxu0
    %v652 = vadd.f32 %v638, %v651
    %v653 = vpop.f32.mrf.mxu0
    %v654 = vadd.f32 %v640, %v653
    %655 = vdwg.mxu0
    %656 = vmatpush.bf16.msra.mxu0 %v511
    %657 = vmatpush.bf16.msra.mxu0 %v510
    %658 = vmatpush.bf16.msra.mxu0 %v509
    %659 = vmatpush.bf16.msra.mxu0 %v508
    %660 = vmatpush.bf16.msra.mxu0 %v507
    %661 = vmatpush.bf16.msra.mxu0 %v506
    %662 = vmatpush.bf16.msra.mxu0 %v505
    %663 = vmatpush.bf16.msra.mxu0 %v504
    %664 = vmatmul.bf16.gmra.mxu0 %v204
    %v665 = vpop.f32.mrf.mxu0
    %v666 = vadd.f32 %v652, %v665
    %v667 = vpop.f32.mrf.mxu0
    %v668 = vadd.f32 %v654, %v667
    %669 = vdwg.mxu0
    %670 = vmatpush.bf16.msra.mxu0 %v519
    %671 = vmatpush.bf16.msra.mxu0 %v518
    %672 = vmatpush.bf16.msra.mxu0 %v517
    %673 = vmatpush.bf16.msra.mxu0 %v516
    %674 = vmatpush.bf16.msra.mxu0 %v515
    %675 = vmatpush.bf16.msra.mxu0 %v514
    %676 = vmatpush.bf16.msra.mxu0 %v513
    %677 = vmatpush.bf16.msra.mxu0 %v512
    %678 = vmatmul.bf16.gmra.mxu0 %v205
    %v679 = vpop.f32.mrf.mxu0
    %v680 = vadd.f32 %v666, %v679
    %v681 = vpop.f32.mrf.mxu0
    %v682 = vadd.f32 %v668, %v681
    %683 = vdwg.mxu0
    %684 = vmatpush.bf16.msra.mxu0 %v527
    %685 = vmatpush.bf16.msra.mxu0 %v526
    %686 = vmatpush.bf16.msra.mxu0 %v525
    %687 = vmatpush.bf16.msra.mxu0 %v524
    %688 = vmatpush.bf16.msra.mxu0 %v523
    %689 = vmatpush.bf16.msra.mxu0 %v522
    %690 = vmatpush.bf16.msra.mxu0 %v521
    %691 = vmatpush.bf16.msra.mxu0 %v520
    %692 = vmatmul.bf16.gmra.mxu0 %v206
    %v693 = vpop.f32.mrf.mxu0
    %v694 = vadd.f32 %v680, %v693
    %v695 = vpop.f32.mrf.mxu0
    %v696 = vadd.f32 %v682, %v695
    %697 = vdwg.mxu0
    %698 = vmatpush.bf16.msra.mxu0 %v535
    %699 = vmatpush.bf16.msra.mxu0 %v534
    %700 = vmatpush.bf16.msra.mxu0 %v533
    %701 = vmatpush.bf16.msra.mxu0 %v532
    %702 = vmatpush.bf16.msra.mxu0 %v531
    %703 = vmatpush.bf16.msra.mxu0 %v530
    %704 = vmatpush.bf16.msra.mxu0 %v529
    %705 = vmatpush.bf16.msra.mxu0 %v528
    %706 = vmatmul.bf16.gmra.mxu0 %v207
    %v707 = vpop.f32.mrf.mxu0
    %v708 = vadd.f32 %v694, %v707
    %v709 = vpop.f32.mrf.mxu0
    %v710 = vadd.f32 %v696, %v709
    %711 = vdwg.mxu0
    %v712 = vtanh.pop %v708
    %v713 = vtanh.pop %v710
    %v714 = vpack.c.bf16 %v713, %v712
    %v715 = vld [vmem:[%s3] sm:$0xf]
    %v716 = vld [vmem:[%s3 + $0x4] sm:$0xf]
    %v717 = vld [vmem:[%s3 + $0x8] sm:$0xf]
    %v718 = vld [vmem:[%s3 + $0xc] sm:$0xf]
    %v719 = vld [vmem:[%s3 + $0x10] sm:$0xf]
    %v720 = vld [vmem:[%s3 + $0x14] sm:$0xf]
    %v721 = vld [vmem:[%s3 + $0x18] sm:$0xf]
    %v722 = vld [vmem:[%s3 + $0x1c] sm:$0xf]
    %v723 = vld [vmem:[%s3 + $0x20] sm:$0xf]
    %v724 = vld [vmem:[%s3 + $0x24] sm:$0xf]
    %v725 = vld [vmem:[%s3 + $0x28] sm:$0xf]
    %v726 = vld [vmem:[%s3 + $0x2c] sm:$0xf]
    %v727 = vld [vmem:[%s3 + $0x30] sm:$0xf]
    %v728 = vld [vmem:[%s3 + $0x34] sm:$0xf]
    %v729 = vld [vmem:[%s3 + $0x38] sm:$0xf]
    %v730 = vld [vmem:[%s3 + $0x3c] sm:$0xf]
    %v731 = vld [vmem:[%s4] sm:$0x1]
    %v733 = vperm.slane %v731, 0
    %v751 = vunpack.c.l.b16 %v715
    %v752 = vunpack.c.l.b16 %v716
    %v753 = vunpack.c.l.b16 %v717
    %v754 = vunpack.c.l.b16 %v718
    %v755 = vunpack.c.l.b16 %v719
    %v756 = vunpack.c.l.b16 %v720
    %v757 = vunpack.c.l.b16 %v721
    %v758 = vunpack.c.l.b16 %v722
    %v759 = vunpack.c.l.b16 %v723
    %v760 = vunpack.c.l.b16 %v724
    %v761 = vunpack.c.l.b16 %v725
    %v762 = vunpack.c.l.b16 %v726
    %v763 = vunpack.c.l.b16 %v727
    %v764 = vunpack.c.l.b16 %v728
    %v765 = vunpack.c.l.b16 %v729
    %v766 = vunpack.c.l.b16 %v730
    %v767 = vpack.c.b16 %v752, %v751
    %v768 = vpack.c.b16 %v754, %v753
    %v769 = vpack.c.b16 %v756, %v755
    %v770 = vpack.c.b16 %v758, %v757
    %v771 = vpack.c.b16 %v760, %v759
    %v772 = vpack.c.b16 %v762, %v761
    %v773 = vpack.c.b16 %v764, %v763
    %v774 = vpack.c.b16 %v766, %v765
    %783 = vmatpush.bf16.msra.mxu0 %v774
    %784 = vmatpush.bf16.msra.mxu0 %v773
    %785 = vmatpush.bf16.msra.mxu0 %v772
    %786 = vmatpush.bf16.msra.mxu0 %v771
    %787 = vmatpush.bf16.msra.mxu0 %v770
    %788 = vmatpush.bf16.msra.mxu0 %v769
    %789 = vmatpush.bf16.msra.mxu0 %v768
    %790 = vmatpush.bf16.msra.mxu0 %v767
    %791 = vmatmul.bf16.gmra.mxu0 %v714
    %v792 = vpop.f32.mrf.mxu0
    %v793 = vadd.f32 %v733, %v792
    %v794 = vpop.f32.mrf.mxu0
    %v795 = vadd.f32 %v733, %v794
    %796 = vdwg.mxu0
    %797 = vst [vmem:[%s5] sm:$0xff] %v793
    %798 = vst [vmem:[%s5 + $0x8] sm:$0xff] %v795
    // Predicated region
    $region26: #{mlp_forward.1} parent=1 // pred_check
      _
    $region27: #{mlp_forward.1} parent=1 // pred_check_branch
      %800 = sbr.rel (0) target = $region29
    $region28: #{mlp_forward.1} parent=1 // pred_region
      _
    $region29: #{mlp_forward.1} parent=1 // pred_fallthru
      _
    // Predicated region
    $region30: #{mlp_forward.1} parent=1 // pred_check
      _
    $region31: #{mlp_forward.1} parent=1 // pred_check_branch
      %802 = sbr.rel (0) target = $region33
    $region32: #{mlp_forward.1} parent=1 // pred_region
      _
    $region33: #{mlp_forward.1} parent=1 // pred_fallthru
      _
    %803 = vsyncpa [#allocation3], 1

</llo_original>
